<compile_context>
chip_gen: v7x
topology: tpu7x:2x2x1
jax: 0.10.0
libtpu: 0.0.40
codegen_flags: <defaults>
</compile_context>

<pallas_src>
import functools

import numpy as np
import jax
import jax.numpy as jnp
from jax import lax
from jax.experimental import pallas as pl
from jax.experimental.pallas import tpu as pltpu

NEG = -1e9  # padding value for the padded tag rows/cols of the transition matrix


# --------------------------------------------------------------------------- #
# Pallas kernel
# --------------------------------------------------------------------------- #
def _crf_viterbi_kernel(trans_t_ref, feats_ref, len_ref,      # inputs
                        decode_ref,                           # output
                        part_ref, last_part_ref, bp_ref,      # scratch
                        *, stop_idx):
    T, TB, KT = feats_ref.shape

    length = len_ref[...]                                     # (TB, 1) int32
    trans_t = trans_t_ref[...]                                # (KT, KT), trans_t[j, i] = trans[i, j]

    # iotas hoisted out of the hot loops (JAX does not CSE broadcast_in_dim).
    iota_prev3 = lax.broadcasted_iota(jnp.int32, (1, 1, KT), 2)   # previous-tag index (3-D)
    iota_tag2 = lax.broadcasted_iota(jnp.int32, (TB, KT), 1)      # tag index (2-D)
    iota_time = lax.broadcasted_iota(jnp.int32, (TB, T), 1)       # time index for lane-dense decode

    # ---- t = 0 : trans[START, :] is already folded into feats[0] by the wrapper -------
    part0 = feats_ref[0]                                      # (TB, KT)
    part_ref[...] = part0
    last_part_ref[...] = part0                                # correct when length == 1

    # ---- forward Viterbi recursion -----------------------------------------------------
    @pl.loop(1, T)
    def _(t):
        part = part_ref[...]                                  # (TB, KT)  indexed by previous tag i
        # cv[b, j, i] = trans[i, j] + partition[b, i]   (feats hoisted out of the 3-D tile)
        cv = trans_t[None, :, :] + part[:, None, :]           # (TB, KT, KT)
        maxv = jnp.max(cv, axis=-1)                           # (TB, KT)
        # first-arg-max over previous tag i (ties -> smallest i, like torch.max)
        bp = jnp.min(jnp.where(cv == maxv[:, :, None], iota_prev3, KT), axis=-1)
        bp = jnp.where(t < length, bp, 0)                     # cur_bp.masked_fill_(mask==0, 0)
        bp_ref[t - 1] = bp
        new_part = maxv + feats_ref[t]                        # feat added after the reduction
        # remember partition at t == length - 1 (the torch gather on partition_history)
        last_part_ref[...] = jnp.where(t == length - 1, new_part, last_part_ref[...])
        part_ref[...] = new_part

    # ---- terminal transition: only the STOP column of the transition matrix is needed --
    stop_row = trans_t_ref[pl.ds(stop_idx, 1), :]             # (1, KT) == trans[:, STOP]
    lv = last_part_ref[...] + stop_row                        # (TB, KT)
    lv_max = jnp.max(lv, axis=-1, keepdims=True)
    ptr0 = jnp.min(jnp.where(lv == lv_max, iota_tag2, KT),
                   axis=-1, keepdims=True)                    # (TB, 1) int32
    ptr0_b = jnp.broadcast_to(ptr0, (TB, KT))

    # ---- back-tracking: build decode lane-dense in registers, one dense store at end ---
    dec0 = jnp.where(iota_time == T - 1, jnp.broadcast_to(ptr0, (TB, T)), 0)

    def bt_body(step, carry):
        ptr, dec = carry
        idx = (T - 2) - step
        bp_row = bp_ref[idx]                                  # (TB, KT) int32
        # lazy version of the torch scatter_: back_points[b, length-1, :] = pointer0
        bp_row = jnp.where(idx == length - 1, ptr0_b, bp_row)
        sel = iota_tag2 == ptr                                # one-hot gather of bp_row[b, ptr[b]]
        new_ptr = jnp.sum(jnp.where(sel, bp_row, 0), axis=1, keepdims=True)  # (TB, 1)
        dec = jnp.where(iota_time == idx, jnp.broadcast_to(new_ptr, (TB, T)), dec)
        return new_ptr, dec

    _, dec = lax.fori_loop(0, T - 1, bt_body, (ptr0, dec0))
    decode_ref[...] = dec


# --------------------------------------------------------------------------- #
# Wrapper (glue: padding, transposes, pallas_call)
# --------------------------------------------------------------------------- #
def crf_viterbi_decode(feats, mask, transitions):
    """feats: (B, T, tag_size+2) f32, mask: (B, T) {0,1}, transitions: (K0, K0).

    Returns (path_score=None, decode_idx (B, T) int32) -- matching the torch code.
    """
    B, T, tg = feats.shape
    KT = ((tg + 7) // 8) * 8                       # tag axes padded to a multiple of 8 only
    TB = min(64, ((B + 7) // 8) * 8)               # batch tile (grid sharded over batch)
    B_pad = ((B + TB - 1) // TB) * TB
    start_idx, stop_idx = tg - 2, tg - 1           # start_tag=-2, stop_tag=-1

    trans = transitions.astype(jnp.float32)
    # trans_t[j, i] = trans[i, j]; padded rows/cols filled with NEG
    trans_t = jnp.full((KT, KT), NEG, jnp.float32).at[:tg, :tg].set(trans.T)

    # time-major feats, zero-padded on the batch and tag axes
    feats_tm = jnp.transpose(feats.astype(jnp.float32), (1, 0, 2))            # (T, B, tg)
    feats_p = jnp.zeros((T, B_pad, KT), jnp.float32).at[:, :B, :tg].set(feats_tm)
    # fold trans[START, :] into feats[0]; padded tag lanes of step 0 become NEG
    start_row = jnp.full((KT,), NEG, jnp.float32).at[:tg].set(trans[start_idx, :])
    feats_p = feats_p.at[0].add(start_row[None, :])

    # per-row sequence lengths (replaces the mask tensor inside the kernel)
    lengths = jnp.sum(mask.astype(jnp.int32), axis=1)                         # (B,)
    lengths_p = jnp.zeros((B_pad, 1), jnp.int32).at[:B, 0].set(lengths)

    kernel = functools.partial(_crf_viterbi_kernel, stop_idx=stop_idx)

    decode_bt = pl.pallas_call(
        kernel,
        out_shape=jax.ShapeDtypeStruct((B_pad, T), jnp.int32),
        grid=(B_pad // TB,),
        in_specs=[
            pl.BlockSpec((KT, KT), lambda b: (0, 0)),
            pl.BlockSpec((T, TB, KT), lambda b: (0, b, 0)),
            pl.BlockSpec((TB, 1), lambda b: (b, 0)),
        ],
        out_specs=pl.BlockSpec((TB, T), lambda b: (b, 0)),
        scratch_shapes=[
            pltpu.VMEM((TB, KT), jnp.float32),    # partition
            pltpu.VMEM((TB, KT), jnp.float32),    # partition at t = length - 1
            pltpu.VMEM((T, TB, KT), jnp.int32),   # back pointers
        ],
        compiler_params=pltpu.CompilerParams(
            dimension_semantics=("parallel",)),
    )(trans_t, feats_p, lengths_p)

    return None, decode_bt[:B, :]


def crf_forward(feats, mask, transitions):
    # torch CRF.forward delegates to viterbi_decode (path_score is None there).
    return crf_viterbi_decode(feats, mask, transitions)


def build_crf_transitions(tagset_size, padding_tag=0, start_tag=-2, stop_tag=-1):
    """Deterministic init matching CRF.__init__."""
    n = tagset_size + 2
    t = np.zeros((n, n), np.float32)
    t[:, start_tag] = -10000.0
    t[stop_tag, :] = -10000.0
    t[:, padding_tag] = -10000.0
    t[padding_tag, :] = -10000.0
    return jnp.asarray(t)


# --------------------------------------------------------------------------- #
# Pure-numpy reference (mirrors the torch viterbi_decode exactly)
# --------------------------------------------------------------------------- #
def ref_viterbi_decode(feats, mask, trans):
    feats = np.asarray(feats, np.float32)
    mask = np.asarray(mask, np.int64)
    trans = np.asarray(trans, np.float32)
    B, T, tg = feats.shape
    start, stop = tg - 2, tg - 1
    length = mask.sum(axis=1)

    partition = feats[:, 0, :] + trans[start, :][None, :]          # (B, tg)
    back_points = []
    part_hist = [partition.copy()]
    for t in range(1, T):
        cv = feats[:, t, None, :] + trans[None, :, :] + partition[:, :, None]  # (B, i, j)
        new_part = cv.max(axis=1)
        bp = cv.argmax(axis=1)
        bp = np.where(mask[:, t:t + 1] == 0, 0, bp)
        back_points.append(bp)
        partition = new_part
        part_hist.append(partition.copy())
    part_hist = np.stack(part_hist, axis=0)                         # (T, B, tg)
    last_part = part_hist[length - 1, np.arange(B), :]              # (B, tg)
    lv = last_part[:, :, None] + trans[None, :, :]                  # (B, i, j)
    last_bp = lv.argmax(axis=1)                                     # (B, tg)
    back_points.append(np.zeros((B, tg), np.int64))
    bp_arr = np.stack(back_points, axis=0)                          # (T, B, tg)
    pointer = last_bp[:, stop]
    for b in range(B):
        bp_arr[length[b] - 1, b, :] = pointer[b]
    decode = np.zeros((T, B), np.int64)
    decode[T - 1] = pointer
    for idx in range(T - 2, -1, -1):
        pointer = bp_arr[idx, np.arange(B), pointer]
        decode[idx] = pointer
    return decode.T                                                 # (B, T)


# --------------------------------------------------------------------------- #
if __name__ == "__main__":
    tagset_size = 5            # real tags + padding (index 0)
    tag_size = tagset_size + 2 # + START, STOP
    B, T = 2, 8

    key = jax.random.PRNGKey(0)
    feats = jax.random.normal(key, (B, T, tag_size), dtype=jnp.float32)
    lengths = np.array([T, 5])
    mask_np = (np.arange(T)[None, :] < lengths[:, None]).astype(np.int32)
    mask = jnp.asarray(mask_np)
    transitions = build_crf_transitions(tagset_size)

    path_score, decode = crf_forward(feats, mask, transitions)
    decode = jax.block_until_ready(decode)

    ref = ref_viterbi_decode(np.asarray(feats), mask_np, np.asarray(transitions))
    if not np.array_equal(np.asarray(decode, np.int64), ref):
        raise AssertionError(f"kernel decode\n{np.asarray(decode)}\n!= reference\n{ref}")

    # TODO(synk): path_score is None in the reference viterbi_decode ("to be implemented"
    # in the PyTorch source), so it is returned as None here as well.
    print("KERNEL_OK")
</pallas_src>

<mosaic_0001>
module attributes {stable_mosaic.version = 11 : i64} {
  func.func @_crf_viterbi_kernel(%arg0: i32, %arg1: memref<8x8xf32, #tpu.memory_space<vmem>>, %arg2: memref<8x8x8xf32, #tpu.memory_space<vmem>>, %arg3: memref<8x1xi32, #tpu.memory_space<vmem>>, %arg4: memref<8x8xi32, #tpu.memory_space<vmem>>, %arg5: memref<8x8xf32, #tpu.memory_space<vmem>>, %arg6: memref<8x8xf32, #tpu.memory_space<vmem>>, %arg7: memref<8x8x8xi32, #tpu.memory_space<vmem>>) attributes {dimension_semantics = [#tpu.dimension_semantics<parallel>], iteration_bounds = array<i64: 1>, scalar_prefetch = 0 : i64, scratch_operands = 3 : i64, tpu.core_type = #tpu.core_type<tc>, window_params = [{pipeline_mode = #tpu.pipeline_mode<synchronous>, transform_indices = @transform_0, window_bounds = array<i64: 8, 8>}, {transform_indices = @transform_1, window_bounds = array<i64: 8, 8, 8>}, {transform_indices = @transform_2, window_bounds = array<i64: 8, 1>}, {transform_indices = @transform_3, window_bounds = array<i64: 8, 8>}]} {
    %c0 = arith.constant 0 : index
    %c0_0 = arith.constant 0 : index
    %0 = vector.load %arg3[%c0, %c0_0] : memref<8x1xi32, #tpu.memory_space<vmem>>, vector<8x1xi32>
    %c0_1 = arith.constant 0 : index
    %c0_2 = arith.constant 0 : index
    %1 = vector.load %arg1[%c0_1, %c0_2] : memref<8x8xf32, #tpu.memory_space<vmem>>, vector<8x8xf32>
    %2 = tpu.iota {dimensions = array<i32: 2>} : vector<1x1x8xi32>
    %3 = tpu.iota {dimensions = array<i32: 1>} : vector<8x8xi32>
    %4 = tpu.iota {dimensions = array<i32: 1>} : vector<8x8xi32>
    %c0_3 = arith.constant 0 : index
    %c0_4 = arith.constant 0 : index
    %c0_5 = arith.constant 0 : index
    %5 = vector.load %arg2[%c0_3, %c0_4, %c0_5] : memref<8x8x8xf32, #tpu.memory_space<vmem>>, vector<1x8x8xf32>
    %6 = vector.shape_cast %5 : vector<1x8x8xf32> to vector<8x8xf32>
    %c0_6 = arith.constant 0 : index
    %c0_7 = arith.constant 0 : index
    %7 = vector.load %arg5[%c0_6, %c0_7] : memref<8x8xf32, #tpu.memory_space<vmem>>, vector<8x8xf32>
    tpu.vector_store %arg5[%c0_6, %c0_7], %6 {strides = array<i32>} : memref<8x8xf32, #tpu.memory_space<vmem>>, vector<8x8xf32>,
    %c0_8 = arith.constant 0 : index
    %c0_9 = arith.constant 0 : index
    %8 = vector.load %arg6[%c0_8, %c0_9] : memref<8x8xf32, #tpu.memory_space<vmem>>, vector<8x8xf32>
    tpu.vector_store %arg6[%c0_8, %c0_9], %6 {strides = array<i32>} : memref<8x8xf32, #tpu.memory_space<vmem>>, vector<8x8xf32>,
    %c0_i32 = arith.constant 0 : i32
    %c7_i32 = arith.constant 7 : i32
    %9 = arith.addi %c0_i32, %c7_i32 : i32
    %c1_i32 = arith.constant 1 : i32
    scf.for %arg8 = %c0_i32 to %9 step %c1_i32  : i32 {
      %c1_i32_23 = arith.constant 1 : i32
      %33 = arith.muli %arg8, %c1_i32_23 : i32
      %c1_i32_24 = arith.constant 1 : i32
      %34 = arith.addi %c1_i32_24, %33 : i32
      %c0_25 = arith.constant 0 : index
      %c0_26 = arith.constant 0 : index
      %35 = vector.load %arg5[%c0_25, %c0_26] : memref<8x8xf32, #tpu.memory_space<vmem>>, vector<8x8xf32>
      %36 = vector.shape_cast %1 : vector<8x8xf32> to vector<1x8x8xf32>
      %37 = vector.shape_cast %35 : vector<8x8xf32> to vector<8x1x8xf32>
      %38 = vector.broadcast %36 : vector<1x8x8xf32> to vector<8x8x8xf32>
      %39 = vector.broadcast %37 : vector<8x1x8xf32> to vector<8x8x8xf32>
      %40 = arith.addf %38, %39 : vector<8x8x8xf32>
      %cst_27 = arith.constant dense<0xFF800000> : vector<8x8xf32>
      %41 = vector.multi_reduction <maximumf>, %40, %cst_27 [2] : vector<8x8x8xf32> to vector<8x8xf32>
      %42 = vector.shape_cast %41 : vector<8x8xf32> to vector<8x8x1xf32>
      %43 = vector.broadcast %42 : vector<8x8x1xf32> to vector<8x8x8xf32>
      %44 = arith.cmpf oeq, %40, %43 : vector<8x8x8xf32>
      %c8_i32_28 = arith.constant 8 : i32
      %45 = vector.shape_cast %2 : vector<1x1x8xi32> to vector<1x1x8xi32>
      %46 = vector.broadcast %45 : vector<1x1x8xi32> to vector<8x8x8xi32>
      %47 = vector.broadcast %c8_i32_28 : i32 to vector<8x8x8xi32>
      %48 = arith.select %44, %46, %47 : vector<8x8x8xi1>, vector<8x8x8xi32>
      %cst_29 = arith.constant dense<2147483647> : vector<8x8xi32>
      %49 = vector.multi_reduction <minsi>, %48, %cst_29 [2] : vector<8x8x8xi32> to vector<8x8xi32>
      %50 = vector.broadcast %34 : i32 to vector<8x1xi32>
      %51 = arith.cmpi slt, %50, %0 : vector<8x1xi32>
      %c0_i32_30 = arith.constant 0 : i32
      %52 = vector.shape_cast %51 : vector<8x1xi1> to vector<8x1xi1>
      %53 = vector.broadcast %52 : vector<8x1xi1> to vector<8x8xi1>
      %54 = vector.broadcast %c0_i32_30 : i32 to vector<8x8xi32>
      %55 = arith.select %53, %49, %54 : vector<8x8xi1>, vector<8x8xi32>
      %c1_i32_31 = arith.constant 1 : i32
      %56 = arith.subi %34, %c1_i32_31 : i32
      %57 = arith.index_cast %56 : i32 to index
      %c0_32 = arith.constant 0 : index
      %c0_33 = arith.constant 0 : index
      %58 = vector.load %arg7[%57, %c0_32, %c0_33] : memref<8x8x8xi32, #tpu.memory_space<vmem>>, vector<1x8x8xi32>
      %59 = vector.shape_cast %58 : vector<1x8x8xi32> to vector<8x8xi32>
      %60 = vector.shape_cast %55 : vector<8x8xi32> to vector<1x8x8xi32>
      tpu.vector_store %arg7[%57, %c0_32, %c0_33], %60 {strides = array<i32>} : memref<8x8x8xi32, #tpu.memory_space<vmem>>, vector<1x8x8xi32>,
      %61 = arith.index_cast %34 : i32 to index
      %c0_34 = arith.constant 0 : index
      %c0_35 = arith.constant 0 : index
      %62 = vector.load %arg2[%61, %c0_34, %c0_35] : memref<8x8x8xf32, #tpu.memory_space<vmem>>, vector<1x8x8xf32>
      %63 = vector.shape_cast %62 : vector<1x8x8xf32> to vector<8x8xf32>
      %64 = arith.addf %41, %63 : vector<8x8xf32>
      %c1_i32_36 = arith.constant 1 : i32
      %65 = vector.broadcast %c1_i32_36 : i32 to vector<8x1xi32>
      %66 = arith.subi %0, %65 : vector<8x1xi32>
      %67 = vector.broadcast %34 : i32 to vector<8x1xi32>
      %68 = arith.cmpi eq, %67, %66 : vector<8x1xi32>
      %c0_37 = arith.constant 0 : index
      %c0_38 = arith.constant 0 : index
      %69 = vector.load %arg6[%c0_37, %c0_38] : memref<8x8xf32, #tpu.memory_space<vmem>>, vector<8x8xf32>
      %70 = vector.shape_cast %68 : vector<8x1xi1> to vector<8x1xi1>
      %71 = vector.broadcast %70 : vector<8x1xi1> to vector<8x8xi1>
      %72 = arith.select %71, %64, %69 : vector<8x8xi1>, vector<8x8xf32>
      %c0_39 = arith.constant 0 : index
      %c0_40 = arith.constant 0 : index
      %73 = vector.load %arg6[%c0_39, %c0_40] : memref<8x8xf32, #tpu.memory_space<vmem>>, vector<8x8xf32>
      tpu.vector_store %arg6[%c0_39, %c0_40], %72 {strides = array<i32>} : memref<8x8xf32, #tpu.memory_space<vmem>>, vector<8x8xf32>,
      %c0_41 = arith.constant 0 : index
      %c0_42 = arith.constant 0 : index
      %74 = vector.load %arg5[%c0_41, %c0_42] : memref<8x8xf32, #tpu.memory_space<vmem>>, vector<8x8xf32>
      tpu.vector_store %arg5[%c0_41, %c0_42], %64 {strides = array<i32>} : memref<8x8xf32, #tpu.memory_space<vmem>>, vector<8x8xf32>,
    }
    %c7_i32_10 = arith.constant 7 : i32
    %c6 = arith.constant 6 : index
    %c0_11 = arith.constant 0 : index
    %10 = vector.load %arg1[%c6, %c0_11] : memref<8x8xf32, #tpu.memory_space<vmem>>, vector<1x8xf32>
    %c0_12 = arith.constant 0 : index
    %c0_13 = arith.constant 0 : index
    %11 = vector.load %arg6[%c0_12, %c0_13] : memref<8x8xf32, #tpu.memory_space<vmem>>, vector<8x8xf32>
    %12 = vector.broadcast %10 : vector<1x8xf32> to vector<8x8xf32>
    %13 = arith.addf %11, %12 : vector<8x8xf32>
    %cst = arith.constant dense<0xFF800000> : vector<8xf32>
    %14 = vector.multi_reduction <maximumf>, %13, %cst [1] : vector<8x8xf32> to vector<8xf32>
    %15 = vector.shape_cast %14 : vector<8xf32> to vector<8x1xf32>
    %16 = vector.broadcast %15 : vector<8x1xf32> to vector<8x8xf32>
    %17 = arith.cmpf oeq, %13, %16 : vector<8x8xf32>
    %c8_i32 = arith.constant 8 : i32
    %18 = vector.broadcast %c8_i32 : i32 to vector<8x8xi32>
    %19 = arith.select %17, %3, %18 : vector<8x8xi1>, vector<8x8xi32>
    %cst_14 = arith.constant dense<2147483647> : vector<8xi32>
    %20 = vector.multi_reduction <minsi>, %19, %cst_14 [1] : vector<8x8xi32> to vector<8xi32>
    %21 = vector.shape_cast %20 : vector<8xi32> to vector<8x1xi32>
    %22 = vector.shape_cast %21 : vector<8x1xi32> to vector<8x1xi32>
    %23 = vector.broadcast %22 : vector<8x1xi32> to vector<8x8xi32>
    %c7_i32_15 = arith.constant 7 : i32
    %24 = vector.broadcast %c7_i32_15 : i32 to vector<8x8xi32>
    %25 = arith.cmpi eq, %4, %24 : vector<8x8xi32>
    %26 = vector.shape_cast %21 : vector<8x1xi32> to vector<8x1xi32>
    %27 = vector.broadcast %26 : vector<8x1xi32> to vector<8x8xi32>
    %c0_i32_16 = arith.constant 0 : i32
    %28 = vector.broadcast %c0_i32_16 : i32 to vector<8x8xi32>
    %29 = arith.select %25, %27, %28 : vector<8x8xi1>, vector<8x8xi32>
    %c0_i32_17 = arith.constant 0 : i32
    %c7_i32_18 = arith.constant 7 : i32
    %30 = arith.addi %c0_i32_17, %c7_i32_18 : i32
    %c1_i32_19 = arith.constant 1 : i32
    %31:2 = scf.for %arg8 = %c0_i32_17 to %30 step %c1_i32_19 iter_args(%arg9 = %21, %arg10 = %29) -> (vector<8x1xi32>, vector<8x8xi32>)  : i32 {
      %c6_i32 = arith.constant 6 : i32
      %33 = arith.subi %c6_i32, %arg8 : i32
      %34 = arith.index_cast %33 : i32 to index
      %c0_23 = arith.constant 0 : index
      %c0_24 = arith.constant 0 : index
      %35 = vector.load %arg7[%34, %c0_23, %c0_24] : memref<8x8x8xi32, #tpu.memory_space<vmem>>, vector<1x8x8xi32>
      %36 = vector.shape_cast %35 : vector<1x8x8xi32> to vector<8x8xi32>
      %c1_i32_25 = arith.constant 1 : i32
      %37 = vector.broadcast %c1_i32_25 : i32 to vector<8x1xi32>
      %38 = arith.subi %0, %37 : vector<8x1xi32>
      %39 = vector.broadcast %33 : i32 to vector<8x1xi32>
      %40 = arith.cmpi eq, %39, %38 : vector<8x1xi32>
      %41 = vector.shape_cast %40 : vector<8x1xi1> to vector<8x1xi1>
      %42 = vector.broadcast %41 : vector<8x1xi1> to vector<8x8xi1>
      %43 = arith.select %42, %23, %36 : vector<8x8xi1>, vector<8x8xi32>
      %44 = vector.broadcast %arg9 : vector<8x1xi32> to vector<8x8xi32>
      %45 = arith.cmpi eq, %3, %44 : vector<8x8xi32>
      %c0_i32_26 = arith.constant 0 : i32
      %46 = vector.broadcast %c0_i32_26 : i32 to vector<8x8xi32>
      %47 = arith.select %45, %43, %46 : vector<8x8xi1>, vector<8x8xi32>
      %cst_27 = arith.constant dense<0> : vector<8xi32>
      %48 = vector.multi_reduction <add>, %47, %cst_27 [1] : vector<8x8xi32> to vector<8xi32>
      %49 = vector.shape_cast %48 : vector<8xi32> to vector<8x1xi32>
      %50 = vector.broadcast %33 : i32 to vector<8x8xi32>
      %51 = arith.cmpi eq, %4, %50 : vector<8x8xi32>
      %52 = vector.shape_cast %49 : vector<8x1xi32> to vector<8x1xi32>
      %53 = vector.broadcast %52 : vector<8x1xi32> to vector<8x8xi32>
      %54 = arith.select %51, %53, %arg10 : vector<8x8xi1>, vector<8x8xi32>
      scf.yield %49, %54 : vector<8x1xi32>, vector<8x8xi32>
    }
    %c7_i32_20 = arith.constant 7 : i32
    %c0_21 = arith.constant 0 : index
    %c0_22 = arith.constant 0 : index
    %32 = vector.load %arg4[%c0_21, %c0_22] : memref<8x8xi32, #tpu.memory_space<vmem>>, vector<8x8xi32>
    tpu.vector_store %arg4[%c0_21, %c0_22], %31#1 {strides = array<i32>} : memref<8x8xi32, #tpu.memory_space<vmem>>, vector<8x8xi32>,
    return
  }
  func.func @transform_0(%arg0: i32) -> (i32, i32) {
    %c0_i32 = arith.constant 0 : i32
    %c0_i32_0 = arith.constant 0 : i32
    %c0_i32_1 = arith.constant 0 : i32
    return %c0_i32, %c0_i32_0 : i32, i32
  }
  func.func @transform_1(%arg0: i32) -> (i32, i32, i32) {
    %c0_i32 = arith.constant 0 : i32
    %c0_i32_0 = arith.constant 0 : i32
    %c0_i32_1 = arith.constant 0 : i32
    return %c0_i32, %arg0, %c0_i32_0 : i32, i32, i32
  }
  func.func @transform_2(%arg0: i32) -> (i32, i32) {
    %c0_i32 = arith.constant 0 : i32
    %c0_i32_0 = arith.constant 0 : i32
    return %arg0, %c0_i32 : i32, i32
  }
  func.func @transform_3(%arg0: i32) -> (i32, i32) {
    %c0_i32 = arith.constant 0 : i32
    %c0_i32_0 = arith.constant 0 : i32
    return %arg0, %c0_i32 : i32, i32
  }
}

</mosaic_0001>

<llo_original>
// kernel: tpu_custom_call.1
$region0: #{tpu_custom_call.1}
  #allocation0 [shape = 'u32[]', space=smem, size = 0x4, offset = 0x4, fixed_abs, tag = 'smem constant byte address 0x4 - core index']
  #allocation1 [shape = 'u32[144,128]{1,0:T(1,128)}', space=vmem, size = 0x12000, scoped, tag = 'internal scratch']
  #allocation2 [shape = 'f32[8,8]{1,0:T(8,128)}', space=vmem, size = 0x1000, scoped, tag = 'scratch operand']
  #allocation3 [shape = 'f32[8,8]{1,0:T(8,128)}', space=vmem, size = 0x1000, scoped, tag = 'scratch operand']
  #allocation4 [shape = 's32[8,8,8]{2,1,0:T(8,128)}', space=vmem, size = 0x8000, scoped, tag = 'scratch operand']
  %s0 = inlined_call_operand.vmem [shape: f32[8,8], index: 0, kind: input, shape index: {}]
  %s1 = inlined_call_operand.hbm [shape: f32[8,8,8], index: 1, kind: input, shape index: {}]
  %s2 = inlined_call_operand.vmem [shape: s32[8,1], index: 2, kind: input, shape index: {}]
  %s3 = inlined_call_operand.hbm [shape: s32[8,8], index: 3, kind: output, shape index: {}]
  %s4 = sld [smem:[#allocation0]]
  $region40: #{tpu_custom_call.1} parent=0
    _
  %s6 = ssub.s32 1, %s4
  %s7 = scalar_select 0, %s6, %s4
  $region1: #{tpu_custom_call.1} parent=0
    #allocation5 [shape = 'u8[32768]{0}', space=vmem, size = 0x8000, scoped, tag = 'input window, operand 1, single buffered']
    #allocation6 [shape = 's32[1]{0}', space=sflag, size = 0x4, scoped, tag = 'scoped memory for tpu_custom_call.1']
    #allocation7 [shape = 's32[1]{0}', space=sflag, size = 0x4, scoped, tag = 'scoped memory for tpu_custom_call.1']
    #allocation8 [shape = 'u8[4096]{0}', space=vmem, size = 0x1000, scoped, tag = 'output window, operand 0, single buffered']
    %8 = vsyncpa [#allocation6], 0
    %9 = vsyncpa [#allocation7], 0
    // Predicated region
    $region2: #{tpu_custom_call.1} parent=1 // pred_check
      _
    $region3: #{tpu_custom_call.1} parent=1 // pred_check_branch
      %11 = sbr.rel (0) target = $region5
    $region4: #{tpu_custom_call.1} parent=1 // pred_region
      _
    $region5: #{tpu_custom_call.1} parent=1 // pred_fallthru
      _
    // Predicated region
    $region6: #{tpu_custom_call.1} parent=1 // pred_check
      _
    $region7: #{tpu_custom_call.1} parent=1 // pred_check_branch
      %13 = sbr.rel (0) target = $region9
    $region8: #{tpu_custom_call.1} parent=1 // pred_region
      %s15 = ssub.s32 1024, 1024
      %16 = vsyncadd [#allocation6], %s15
      %s17 = sshll.u32 [#allocation5], 4
      %s18 = int_to_ptr.vmem [resolvable:$true] %s17
      %23 = dma.hbm_to_vmem [thread:$0]  %s1, 1024, %s18, [#allocation6], 128, 128, 8
    $region9: #{tpu_custom_call.1} parent=1 // pred_fallthru
      _
    // Predicated region
    $region10: #{tpu_custom_call.1} parent=1 // pred_check
      _
    $region11: #{tpu_custom_call.1} parent=1 // pred_check_branch
      %25 = sbr.rel (0) target = $region13
    $region12: #{tpu_custom_call.1} parent=1 // pred_region
      _
    $region13: #{tpu_custom_call.1} parent=1 // pred_fallthru
      _
    // Predicated region
    $region14: #{tpu_custom_call.1} parent=1 // pred_check
      _
    $region15: #{tpu_custom_call.1} parent=1 // pred_check_branch
      %27 = sbr.rel (0) target = $region17
    $region16: #{tpu_custom_call.1} parent=1 // pred_region
      %28 = dma.done [#allocation6], 1024
    $region17: #{tpu_custom_call.1} parent=1 // pred_fallthru
      _
    %v29 = vld [vmem:[%s2] sm:$0xff]
    %v30 = vld [vmem:[%s0] sm:$0xff]
    %v31 = vlaneseq
    %v32 = vand.u32 %v31, 127
    %v33 = vld [vmem:[#allocation5] sm:$0xff]
    %vm34 = vcmask 64512
    %35 = vst.msk [vmem:[#allocation2] sm:$0xff] %vm34, %v33
    %36 = vst.msk [vmem:[#allocation3] sm:$0xff] %vm34, %v33
    loop: start=0, step=1, limit=7
    $region18: #{tpu_custom_call.1} parent=1 // loop_pre_header
      _
    $region19: #{tpu_custom_call.1} parent=1 // loop_header
      %s38 = sphi 0, %s42
      %p39 = scmp.ge.s32.totalorder %s38, 7
    $region20: #{tpu_custom_call.1} parent=1 // loop_header_branch
      %41 = sbr.rel (%p39) target = $region24
    $region21: #{tpu_custom_call.1} parent=1 // loop_body
      %s43 = sadd.s32 %s38, 1
      %v44 = vld [vmem:[#allocation2] sm:$0xff]
      %v46 = vcombine.high %v44, %v44
      %v48 = vunpack.c.l.s4 1966171168
      %v49 = vunpack.c.0.s8 %v48
      %v50 = vlaneseq
      %v51 = vshrl.u32 %v50, 7
      %v52 = vsub.s32 %v49, %v51
      %v53 = vrot.slane %v44, %v52
      %v55 = vunpack.c.l.s4 1966171168
      %v56 = vunpack.c.0.s8 %v55
      %v57 = vlaneseq
      %v58 = vshrl.u32 %v57, 7
      %v59 = vsub.s32 %v56, %v58
      %v60 = vrot.slane %v46, %v59
      %v61 = vcombine.high %v53, %v53
      %v62 = vcombine.high %v60, %v60
      %v64 = vunpack.c.l.s4 1966171168
      %v65 = vunpack.c.0.s8 %v64
      %v66 = vlaneseq
      %v67 = vshrl.u32 %v66, 7
      %v68 = vsub.s32 %v65, %v67
      %v69 = vrot.slane %v53, %v68
      %v71 = vunpack.c.l.s4 1966171168
      %v72 = vunpack.c.0.s8 %v71
      %v73 = vlaneseq
      %v74 = vshrl.u32 %v73, 7
      %v75 = vsub.s32 %v72, %v74
      %v76 = vrot.slane %v60, %v75
      %v78 = vunpack.c.l.s4 1966171168
      %v79 = vunpack.c.0.s8 %v78
      %v80 = vlaneseq
      %v81 = vshrl.u32 %v80, 7
      %v82 = vsub.s32 %v79, %v81
      %v83 = vrot.slane %v61, %v82
      %v85 = vunpack.c.l.s4 1966171168
      %v86 = vunpack.c.0.s8 %v85
      %v87 = vlaneseq
      %v88 = vshrl.u32 %v87, 7
      %v89 = vsub.s32 %v86, %v88
      %v90 = vrot.slane %v62, %v89
      %v91 = vcombine.high %v69, %v69
      %v92 = vcombine.high %v76, %v76
      %v93 = vcombine.high %v83, %v83
      %v94 = vcombine.high %v90, %v90
      %v95 = vlaneseq
      %v96 = vshrl.u32 %v95, 7
      %v97 = vsub.s32 0, %v96
      %v98 = vrot.slane %v69, %v97
      %v99 = vlaneseq
      %v100 = vshrl.u32 %v99, 7
      %v101 = vsub.s32 0, %v100
      %v102 = vrot.slane %v83, %v101
      %v103 = vlaneseq
      %v104 = vshrl.u32 %v103, 7
      %v105 = vsub.s32 0, %v104
      %v106 = vrot.slane %v91, %v105
      %v107 = vlaneseq
      %v108 = vshrl.u32 %v107, 7
      %v109 = vsub.s32 0, %v108
      %v110 = vrot.slane %v93, %v109
      %v111 = vlaneseq
      %v112 = vshrl.u32 %v111, 7
      %v113 = vsub.s32 0, %v112
      %v114 = vrot.slane %v76, %v113
      %v115 = vlaneseq
      %v116 = vshrl.u32 %v115, 7
      %v117 = vsub.s32 0, %v116
      %v118 = vrot.slane %v90, %v117
      %v119 = vlaneseq
      %v120 = vshrl.u32 %v119, 7
      %v121 = vsub.s32 0, %v120
      %v122 = vrot.slane %v92, %v121
      %v123 = vlaneseq
      %v124 = vshrl.u32 %v123, 7
      %v125 = vsub.s32 0, %v124
      %v126 = vrot.slane %v94, %v125
      %v135 = vadd.f32 %v30, %v98
      %v136 = vadd.f32 %v30, %v102
      %v137 = vadd.f32 %v30, %v106
      %v138 = vadd.f32 %v30, %v110
      %v139 = vadd.f32 %v30, %v114
      %v140 = vadd.f32 %v30, %v118
      %v141 = vadd.f32 %v30, %v122
      %v142 = vadd.f32 %v30, %v126
      %v143 = vsel %vm34, %v135, -inf
      %144 = vmax.xlane.f32.xlu0 %v143
      %v145 = vpop.xlane.xlu0 %144
      %v146 = vsel %vm34, %v136, -inf
      %147 = vmax.xlane.f32.xlu0 %v146
      %v148 = vpop.xlane.xlu0 %147
      %v149 = vsel %vm34, %v137, -inf
      %150 = vmax.xlane.f32.xlu0 %v149
      %v151 = vpop.xlane.xlu0 %150
      %v152 = vsel %vm34, %v138, -inf
      %153 = vmax.xlane.f32.xlu0 %v152
      %v154 = vpop.xlane.xlu0 %153
      %v155 = vsel %vm34, %v139, -inf
      %156 = vmax.xlane.f32.xlu0 %v155
      %v157 = vpop.xlane.xlu0 %156
      %v158 = vsel %vm34, %v140, -inf
      %159 = vmax.xlane.f32.xlu0 %v158
      %v160 = vpop.xlane.xlu0 %159
      %v161 = vsel %vm34, %v141, -inf
      %162 = vmax.xlane.f32.xlu0 %v161
      %v163 = vpop.xlane.xlu0 %162
      %v164 = vsel %vm34, %v142, -inf
      %165 = vmax.xlane.f32.xlu0 %v164
      %v166 = vpop.xlane.xlu0 %165
      %vm167 = vcmp.eq.f32.partialorder %v135, %v145
      %vm168 = vcmp.eq.f32.partialorder %v136, %v148
      %vm169 = vcmp.eq.f32.partialorder %v137, %v151
      %vm170 = vcmp.eq.f32.partialorder %v138, %v154
      %vm171 = vcmp.eq.f32.partialorder %v139, %v157
      %vm172 = vcmp.eq.f32.partialorder %v140, %v160
      %vm173 = vcmp.eq.f32.partialorder %v141, %v163
      %vm174 = vcmp.eq.f32.partialorder %v142, %v166
      %v175 = vsel %vm167, %v32, 8
      %v176 = vsel %vm168, %v32, 8
      %v177 = vsel %vm169, %v32, 8
      %v178 = vsel %vm170, %v32, 8
      %v179 = vsel %vm171, %v32, 8
      %v180 = vsel %vm172, %v32, 8
      %v181 = vsel %vm173, %v32, 8
      %v182 = vsel %vm174, %v32, 8
      %v183 = vsel %vm34, %v175, 2147483647
      %v184 = vand.u32 %v183, 65535
      %v185 = vshra.s32 %v183, 16
      %v186 = vcvt.s32.f32 %v184
      %v187 = vcvt.s32.f32 %v185
      %188 = vmin.xlane.f32.xlu0 %v187
      %v189 = vpop.xlane.xlu0 %188
      %vm190 = vcmp.eq.f32.partialorder %v187, %v189
      %v191 = vsel %vm190, %v186, inf
      %192 = vmin.xlane.f32.xlu0 %v191
      %v193 = vpop.xlane.xlu0 %192
      %v194 = vcvt.f32.s32 %v193
      %v195 = vcvt.f32.s32 %v189
      %v196 = vshll.u32 %v195, 16
      %v197 = vadd.s32 %v196, %v194
      %v198 = vsel %vm34, %v176, 2147483647
      %v199 = vand.u32 %v198, 65535
      %v200 = vshra.s32 %v198, 16
      %v201 = vcvt.s32.f32 %v199
      %v202 = vcvt.s32.f32 %v200
      %203 = vmin.xlane.f32.xlu0 %v202
      %v204 = vpop.xlane.xlu0 %203
      %vm205 = vcmp.eq.f32.partialorder %v202, %v204
      %v206 = vsel %vm205, %v201, inf
      %207 = vmin.xlane.f32.xlu0 %v206
      %v208 = vpop.xlane.xlu0 %207
      %v209 = vcvt.f32.s32 %v208
      %v210 = vcvt.f32.s32 %v204
      %v211 = vshll.u32 %v210, 16
      %v212 = vadd.s32 %v211, %v209
      %v213 = vsel %vm34, %v177, 2147483647
      %v214 = vand.u32 %v213, 65535
      %v215 = vshra.s32 %v213, 16
      %v216 = vcvt.s32.f32 %v214
      %v217 = vcvt.s32.f32 %v215
      %218 = vmin.xlane.f32.xlu0 %v217
      %v219 = vpop.xlane.xlu0 %218
      %vm220 = vcmp.eq.f32.partialorder %v217, %v219
      %v221 = vsel %vm220, %v216, inf
      %222 = vmin.xlane.f32.xlu0 %v221
      %v223 = vpop.xlane.xlu0 %222
      %v224 = vcvt.f32.s32 %v223
      %v225 = vcvt.f32.s32 %v219
      %v226 = vshll.u32 %v225, 16
      %v227 = vadd.s32 %v226, %v224
      %v228 = vsel %vm34, %v178, 2147483647
      %v229 = vand.u32 %v228, 65535
      %v230 = vshra.s32 %v228, 16
      %v231 = vcvt.s32.f32 %v229
      %v232 = vcvt.s32.f32 %v230
      %233 = vmin.xlane.f32.xlu0 %v232
      %v234 = vpop.xlane.xlu0 %233
      %vm235 = vcmp.eq.f32.partialorder %v232, %v234
      %v236 = vsel %vm235, %v231, inf
      %237 = vmin.xlane.f32.xlu0 %v236
      %v238 = vpop.xlane.xlu0 %237
      %v239 = vcvt.f32.s32 %v238
      %v240 = vcvt.f32.s32 %v234
      %v241 = vshll.u32 %v240, 16
      %v242 = vadd.s32 %v241, %v239
      %v243 = vsel %vm34, %v179, 2147483647
      %v244 = vand.u32 %v243, 65535
      %v245 = vshra.s32 %v243, 16
      %v246 = vcvt.s32.f32 %v244
      %v247 = vcvt.s32.f32 %v245
      %248 = vmin.xlane.f32.xlu0 %v247
      %v249 = vpop.xlane.xlu0 %248
      %vm250 = vcmp.eq.f32.partialorder %v247, %v249
      %v251 = vsel %vm250, %v246, inf
      %252 = vmin.xlane.f32.xlu0 %v251
      %v253 = vpop.xlane.xlu0 %252
      %v254 = vcvt.f32.s32 %v253
      %v255 = vcvt.f32.s32 %v249
      %v256 = vshll.u32 %v255, 16
      %v257 = vadd.s32 %v256, %v254
      %v258 = vsel %vm34, %v180, 2147483647
      %v259 = vand.u32 %v258, 65535
      %v260 = vshra.s32 %v258, 16
      %v261 = vcvt.s32.f32 %v259
      %v262 = vcvt.s32.f32 %v260
      %263 = vmin.xlane.f32.xlu0 %v262
      %v264 = vpop.xlane.xlu0 %263
      %vm265 = vcmp.eq.f32.partialorder %v262, %v264
      %v266 = vsel %vm265, %v261, inf
      %267 = vmin.xlane.f32.xlu0 %v266
      %v268 = vpop.xlane.xlu0 %267
      %v269 = vcvt.f32.s32 %v268
      %v270 = vcvt.f32.s32 %v264
      %v271 = vshll.u32 %v270, 16
      %v272 = vadd.s32 %v271, %v269
      %v273 = vsel %vm34, %v181, 2147483647
      %v274 = vand.u32 %v273, 65535
      %v275 = vshra.s32 %v273, 16
      %v276 = vcvt.s32.f32 %v274
      %v277 = vcvt.s32.f32 %v275
      %278 = vmin.xlane.f32.xlu0 %v277
      %v279 = vpop.xlane.xlu0 %278
      %vm280 = vcmp.eq.f32.partialorder %v277, %v279
      %v281 = vsel %vm280, %v276, inf
      %282 = vmin.xlane.f32.xlu0 %v281
      %v283 = vpop.xlane.xlu0 %282
      %v284 = vcvt.f32.s32 %v283
      %v285 = vcvt.f32.s32 %v279
      %v286 = vshll.u32 %v285, 16
      %v287 = vadd.s32 %v286, %v284
      %v288 = vsel %vm34, %v182, 2147483647
      %v289 = vand.u32 %v288, 65535
      %v290 = vshra.s32 %v288, 16
      %v291 = vcvt.s32.f32 %v289
      %v292 = vcvt.s32.f32 %v290
      %293 = vmin.xlane.f32.xlu0 %v292
      %v294 = vpop.xlane.xlu0 %293
      %vm295 = vcmp.eq.f32.partialorder %v292, %v294
      %v296 = vsel %vm295, %v291, inf
      %297 = vmin.xlane.f32.xlu0 %v296
      %v298 = vpop.xlane.xlu0 %297
      %v299 = vcvt.f32.s32 %v298
      %v300 = vcvt.f32.s32 %v294
      %v301 = vshll.u32 %v300, 16
      %v302 = vadd.s32 %v301, %v299
      %v303 = vstv %s43
      %vm304 = vcmp.lt.s32.totalorder %v303, %v29
      %v305 = vsel %vm304, 1, 0
      %306 = vset.pattern.permute.xlu0 0
      %307 = vperm.xlu0 %306, %v305
      %v308 = vpop.permute.xlu0 %307
      %vm309 = vcmp.eq.s32.totalorder %v308, 1
      %v310 = vlaneseq
      %v311 = vshrl.u32 %v310, 7
      %v312 = vsub.s32 %v32, %v311
      %v313 = vrot.slane %v197, %v312
      %v314 = vlaneseq
      %v315 = vshrl.u32 %v314, 7
      %v316 = vsub.s32 %v32, %v315
      %v317 = vrot.slane %v212, %v316
      %v318 = vlaneseq
      %v319 = vshrl.u32 %v318, 7
      %v320 = vsub.s32 %v32, %v319
      %v321 = vrot.slane %v227, %v320
      %v322 = vlaneseq
      %v323 = vshrl.u32 %v322, 7
      %v324 = vsub.s32 %v32, %v323
      %v325 = vrot.slane %v242, %v324
      %v326 = vlaneseq
      %v327 = vshrl.u32 %v326, 7
      %v328 = vsub.s32 %v32, %v327
      %v329 = vrot.slane %v257, %v328
      %v330 = vlaneseq
      %v331 = vshrl.u32 %v330, 7
      %v332 = vsub.s32 %v32, %v331
      %v333 = vrot.slane %v272, %v332
      %v334 = vlaneseq
      %v335 = vshrl.u32 %v334, 7
      %v336 = vsub.s32 %v32, %v335
      %v337 = vrot.slane %v287, %v336
      %v338 = vlaneseq
      %v339 = vshrl.u32 %v338, 7
      %v340 = vsub.s32 %v32, %v339
      %v341 = vrot.slane %v302, %v340
      %vm342 = vcmask 1041409
      %v343 = vsel %vm342, %v317, %v313
      %vm344 = vcmask 1042434
      %v345 = vsel %vm344, %v321, %v343
      %vm346 = vcmask 1043459
      %v347 = vsel %vm346, %v325, %v345
      %vm348 = vcmask 1044484
      %v349 = vsel %vm348, %v329, %v347
      %vm350 = vcmask 1045509
      %v351 = vsel %vm350, %v333, %v349
      %vm352 = vcmask 1046534
      %v353 = vsel %vm352, %v337, %v351
      %vm354 = vcmask 1047559
      %v355 = vsel %vm354, %v341, %v353
      %v356 = vsel %vm309, %v355, 0
      %s357 = smul.u32 %s38, 8
      %s358 = scalar_lea.vmem [#allocation4], %s357
      %359 = vst.msk [vmem:[%s358] sm:$0xff] %vm34, %v356
      %s360 = smul.u32 %s43, 8
      %s361 = scalar_lea.vmem [#allocation5], %s360
      %v362 = vld [vmem:[%s361] sm:$0xff]
      %v364 = vlaneseq
      %v365 = vshrl.u32 %v364, 7
      %v366 = vsub.s32 0, %v365
      %v367 = vrot.slane %v362, %v366
      %369 = vbcast.lane.b32.xlu0 %v367, 256
      %v370 = vpop.permute.xlu0 %369
      %v371 = vlaneseq
      %v372 = vshrl.u32 %v371, 7
      %v373 = vsub.s32 1, %v372
      %v374 = vrot.slane %v362, %v373
      %376 = vbcast.lane.b32.xlu0 %v374, 256
      %v377 = vpop.permute.xlu0 %376
      %v378 = vlaneseq
      %v379 = vshrl.u32 %v378, 7
      %v380 = vsub.s32 2, %v379
      %v381 = vrot.slane %v362, %v380
      %383 = vbcast.lane.b32.xlu0 %v381, 256
      %v384 = vpop.permute.xlu0 %383
      %v385 = vlaneseq
      %v386 = vshrl.u32 %v385, 7
      %v387 = vsub.s32 3, %v386
      %v388 = vrot.slane %v362, %v387
      %390 = vbcast.lane.b32.xlu0 %v388, 256
      %v391 = vpop.permute.xlu0 %390
      %v392 = vlaneseq
      %v393 = vshrl.u32 %v392, 7
      %v394 = vsub.s32 4, %v393
      %v395 = vrot.slane %v362, %v394
      %397 = vbcast.lane.b32.xlu0 %v395, 256
      %v398 = vpop.permute.xlu0 %397
      %v399 = vlaneseq
      %v400 = vshrl.u32 %v399, 7
      %v401 = vsub.s32 5, %v400
      %v402 = vrot.slane %v362, %v401
      %404 = vbcast.lane.b32.xlu0 %v402, 256
      %v405 = vpop.permute.xlu0 %404
      %v406 = vlaneseq
      %v407 = vshrl.u32 %v406, 7
      %v408 = vsub.s32 6, %v407
      %v409 = vrot.slane %v362, %v408
      %411 = vbcast.lane.b32.xlu0 %v409, 256
      %v412 = vpop.permute.xlu0 %411
      %v413 = vlaneseq
      %v414 = vshrl.u32 %v413, 7
      %v415 = vsub.s32 7, %v414
      %v416 = vrot.slane %v362, %v415
      %418 = vbcast.lane.b32.xlu0 %v416, 256
      %v419 = vpop.permute.xlu0 %418
      %v428 = vadd.f32 %v145, %v370
      %v429 = vadd.f32 %v148, %v377
      %v430 = vadd.f32 %v151, %v384
      %v431 = vadd.f32 %v154, %v391
      %v432 = vadd.f32 %v157, %v398
      %v433 = vadd.f32 %v160, %v405
      %v434 = vadd.f32 %v163, %v412
      %v435 = vadd.f32 %v166, %v419
      %v436 = vsub.s32 %v29, 1
      %vm437 = vcmp.eq.s32.totalorder %v303, %v436
      %v438 = vld [vmem:[#allocation3] sm:$0xff]
      %v439 = vsel %vm437, 1, 0
      %440 = vset.pattern.permute.xlu0 0
      %441 = vperm.xlu0 %440, %v439
      %v442 = vpop.permute.xlu0 %441
      %vm443 = vcmp.eq.s32.totalorder %v442, 1
      %452 = vset.pattern.permute.xlu0 0
      %453 = vperm.xlu0 %452, %v428
      %v454 = vpop.permute.xlu0 %453
      %455 = vset.pattern.permute.xlu0 0
      %456 = vperm.xlu0 %455, %v429
      %v457 = vpop.permute.xlu0 %456
      %458 = vset.pattern.permute.xlu0 0
      %459 = vperm.xlu0 %458, %v430
      %v460 = vpop.permute.xlu0 %459
      %461 = vset.pattern.permute.xlu0 0
      %462 = vperm.xlu0 %461, %v431
      %v463 = vpop.permute.xlu0 %462
      %464 = vset.pattern.permute.xlu0 0
      %465 = vperm.xlu0 %464, %v432
      %v466 = vpop.permute.xlu0 %465
      %467 = vset.pattern.permute.xlu0 0
      %468 = vperm.xlu0 %467, %v433
      %v469 = vpop.permute.xlu0 %468
      %470 = vset.pattern.permute.xlu0 0
      %471 = vperm.xlu0 %470, %v434
      %v472 = vpop.permute.xlu0 %471
      %473 = vset.pattern.permute.xlu0 0
      %474 = vperm.xlu0 %473, %v435
      %v475 = vpop.permute.xlu0 %474
      %v476 = vlaneseq
      %v477 = vshrl.u32 %v476, 7
      %v478 = vsub.s32 %v32, %v477
      %v479 = vrot.slane %v454, %v478
      %v480 = vlaneseq
      %v481 = vshrl.u32 %v480, 7
      %v482 = vsub.s32 %v32, %v481
      %v483 = vrot.slane %v457, %v482
      %v484 = vlaneseq
      %v485 = vshrl.u32 %v484, 7
      %v486 = vsub.s32 %v32, %v485
      %v487 = vrot.slane %v460, %v486
      %v488 = vlaneseq
      %v489 = vshrl.u32 %v488, 7
      %v490 = vsub.s32 %v32, %v489
      %v491 = vrot.slane %v463, %v490
      %v492 = vlaneseq
      %v493 = vshrl.u32 %v492, 7
      %v494 = vsub.s32 %v32, %v493
      %v495 = vrot.slane %v466, %v494
      %v496 = vlaneseq
      %v497 = vshrl.u32 %v496, 7
      %v498 = vsub.s32 %v32, %v497
      %v499 = vrot.slane %v469, %v498
      %v500 = vlaneseq
      %v501 = vshrl.u32 %v500, 7
      %v502 = vsub.s32 %v32, %v501
      %v503 = vrot.slane %v472, %v502
      %v504 = vlaneseq
      %v505 = vshrl.u32 %v504, 7
      %v506 = vsub.s32 %v32, %v505
      %v507 = vrot.slane %v475, %v506
      %v508 = vsel %vm342, %v483, %v479
      %v509 = vsel %vm344, %v487, %v508
      %v510 = vsel %vm346, %v491, %v509
      %v511 = vsel %vm348, %v495, %v510
      %v512 = vsel %vm350, %v499, %v511
      %v513 = vsel %vm352, %v503, %v512
      %v514 = vsel %vm354, %v507, %v513
      %v516 = vsel %vm443, %v514, %v438
      %517 = vst.msk [vmem:[#allocation3] sm:$0xff] %vm34, %v516
      %518 = vst.msk [vmem:[#allocation2] sm:$0xff] %vm34, %v514
    $region22: #{tpu_custom_call.1} parent=1 // loop_footer
      %s42 = sadd.s32 1, %s38
    $region23: #{tpu_custom_call.1} parent=1 // loop_footer_branch
      %37 = sbr.rel target = $region19
    $region24: #{tpu_custom_call.1} parent=1 // loop_exit
      _
    %v519 = vld [vmem:[%s0 + $0x6] sm:$0x1]
    %v520 = vld [vmem:[#allocation3] sm:$0xff]
    %v521 = vlaneseq
    %v522 = vshrl.u32 %v521, 7
    %v523 = vsub.s32 0, %v522
    %v524 = vrot.slane %v519, %v523
    %v525 = vadd.f32 %v520, %v524
    %v526 = vsel %vm34, %v525, -inf
    %527 = vmax.xlane.f32.xlu0 %v526
    %v528 = vpop.xlane.xlu0 %527
    %vm529 = vcmp.eq.f32.partialorder %v525, %v528
    %v530 = vsel %vm529, %v32, 8
    %v531 = vsel %vm34, %v530, 2147483647
    %v532 = vand.u32 %v531, 65535
    %v533 = vshra.s32 %v531, 16
    %v534 = vcvt.s32.f32 %v532
    %v535 = vcvt.s32.f32 %v533
    %536 = vmin.xlane.f32.xlu0 %v535
    %v537 = vpop.xlane.xlu0 %536
    %vm538 = vcmp.eq.f32.partialorder %v535, %v537
    %v539 = vsel %vm538, %v534, inf
    %540 = vmin.xlane.f32.xlu0 %v539
    %v541 = vpop.xlane.xlu0 %540
    %v542 = vcvt.f32.s32 %v541
    %v543 = vcvt.f32.s32 %v537
    %v544 = vshll.u32 %v543, 16
    %v545 = vadd.s32 %v544, %v542
    %vm546 = vcmp.eq.s32.totalorder %v32, 7
    %v547 = vsel %vm546, %v545, 0
    loop: start=0, step=1, limit=7
    $region25: #{tpu_custom_call.1} parent=1 // loop_pre_header
      _
    $region26: #{tpu_custom_call.1} parent=1 // loop_header
      %s549 = sphi 0, %s553
      %p550 = scmp.ge.s32.totalorder %s549, 7
      %v554 = vphi %v545, %v583
      %v555 = vphi %v547, %v585
    $region27: #{tpu_custom_call.1} parent=1 // loop_header_branch
      %552 = sbr.rel (%p550) target = $region31
    $region28: #{tpu_custom_call.1} parent=1 // loop_body
      %s556 = ssub.s32 6, %s549
      %s557 = smul.u32 %s556, 8
      %s558 = scalar_lea.vmem [#allocation4], %s557
      %v559 = vld [vmem:[%s558] sm:$0xff]
      %v560 = vsub.s32 %v29, 1
      %v561 = vstv %s556
      %vm562 = vcmp.eq.s32.totalorder %v561, %v560
      %v563 = vsel %vm562, 1, 0
      %564 = vset.pattern.permute.xlu0 0
      %565 = vperm.xlu0 %564, %v563
      %v566 = vpop.permute.xlu0 %565
      %vm567 = vcmp.eq.s32.totalorder %v566, 1
      %v568 = vsel %vm567, %v545, %v559
      %vm569 = vcmp.eq.s32.totalorder %v32, %v554
      %v570 = vsel %vm569, %v568, 0
      %v571 = vsel %vm34, %v570, 0
      %v572 = vand.u32 %v571, 65535
      %v573 = vshrl.u32 %v571, 16
      %v574 = vcvt.s32.f32 %v572
      %v575 = vcvt.s32.f32 %v573
      %576 = vadd.xlane.f32.xlu0 %v574
      %v577 = vpop.xlane.xlu0 %576
      %578 = vadd.xlane.f32.xlu0 %v575
      %v579 = vpop.xlane.xlu0 %578
      %v580 = vcvt.f32.s32 %v577
      %v581 = vcvt.f32.s32 %v579
      %v582 = vshll.u32 %v581, 16
      %v583 = vadd.s32 %v582, %v580
      %vm584 = vcmp.eq.s32.totalorder %v32, %v561
      %v585 = vsel %vm584, %v583, %v555
    $region29: #{tpu_custom_call.1} parent=1 // loop_footer
      %s553 = sadd.s32 1, %s549
    $region30: #{tpu_custom_call.1} parent=1 // loop_footer_branch
      %548 = sbr.rel target = $region26
    $region31: #{tpu_custom_call.1} parent=1 // loop_exit
      _
    %586 = vst.msk [vmem:[#allocation8] sm:$0xff] %vm34, %v555
    // Predicated region
    $region32: #{tpu_custom_call.1} parent=1 // pred_check
      _
    $region33: #{tpu_custom_call.1} parent=1 // pred_check_branch
      %588 = sbr.rel (0) target = $region35
    $region34: #{tpu_custom_call.1} parent=1 // pred_region
      %s590 = ssub.s32 128, 128
      %591 = vsyncadd [#allocation7], %s590
      %s593 = sshll.u32 [#allocation8], 4
      %s594 = int_to_ptr.vmem [resolvable:$true] %s593
      %596 = dma.vmem_to_hbm [thread:$0]  %s594, 128, %s3, [#allocation7]
    $region35: #{tpu_custom_call.1} parent=1 // pred_fallthru
      _
    // Predicated region
    $region36: #{tpu_custom_call.1} parent=1 // pred_check
      _
    $region37: #{tpu_custom_call.1} parent=1 // pred_check_branch
      %598 = sbr.rel (0) target = $region39
    $region38: #{tpu_custom_call.1} parent=1 // pred_region
      %599 = dma.done [#allocation7], 128
    $region39: #{tpu_custom_call.1} parent=1 // pred_fallthru
      _
    %600 = vsyncpa [#allocation6], 1
    %601 = vsyncpa [#allocation7], 1

</llo_original>
